<compile_context>
chip_gen: v7x
topology: tpu7x:2x2x1
jax: 0.10.0
libtpu: 0.0.40
codegen_flags: <defaults>
</compile_context>

<pallas_src>
import functools

import jax
import jax.numpy as jnp
from jax.experimental import pallas as pl
from jax.experimental.pallas import tpu as pltpu


def _quantize_kernel(x_ref, o_ref, *, n_levels_minus_1):
    # Block = (TB, D) slab of rows; each row is one full sample, so row-wise
    # reductions reproduce the per-sample ("batch=True") statistics.  The
    # last partial grid block may contain out-of-range rows; statistics stay
    # strictly per-row, so garbage rows never contaminate valid rows and their
    # out-of-range writes are discarded by Pallas.
    x = x_ref[...].astype(jnp.float32)                    # (TB, D)

    x_min = jnp.min(x, axis=1, keepdims=True)             # (TB, 1)
    x_max = jnp.max(x, axis=1, keepdims=True)             # (TB, 1)
    rng = x_max - x_min
    has_range = rng > 0.0
    # Guard against constant rows (range == 0): output == input there.
    safe_rng = jnp.where(has_range, rng, 1.0)

    levels = jnp.float32(n_levels_minus_1)
    inv_scale = levels / safe_rng                         # per-row only, cheap
    scale = safe_rng / levels                             # per-row only, cheap

    q = jnp.clip(jnp.round((x - x_min) * inv_scale), 0.0, levels)
    y = q * scale + x_min
    y = jnp.where(has_range, y, x)

    o_ref[...] = y.astype(o_ref.dtype)


def _vmem_budget():
    """(working_set_budget_bytes, vmem_limit_bytes) per TPU generation.

    v5e / v6e have 128 MiB physical VMEM -> large slabs.
    v7x has only 64 MiB per TensorCore -> keep headroom for the
    double-buffered in/out windows plus compiler scratch.
    """
    try:
        kind = jax.devices()[0].device_kind.lower()
    except Exception:  # pragma: no cover - defensive
        kind = ""
    if "v7" in kind:
        return 16 * 1024 * 1024, 40 * 1024 * 1024
    return 32 * 1024 * 1024, 64 * 1024 * 1024


def _choose_block_rows(n, d, itemsize, budget):
    """Rows per grid step.  Working set = (in + out) x 2 double-buffers of
    (tb, d) each.  Multiple of 8 (or the full batch dim for tiny n)."""
    tb = budget // (4 * d * itemsize)
    tb = max(8, (tb // 8) * 8)
    if tb >= n:
        if n >= 16:
            # Force >= 2 grid steps so the "parallel" axis can be split across
            # the two TensorCores on v7x (one extra cheap step on v5e/v6e).
            half = -(-n // 2)
            tb = ((half + 7) // 8) * 8
        else:
            tb = n  # block dim == full array dim is always legal
    return tb


def _reference_quantize(x, bit):
    """Pure-JAX reference (per-sample uniform min-max fake quantization),
    written with the same arithmetic sequence as the kernel.  Also used as
    the fused small-tensor fast path."""
    if bit is None:
        return x
    n = x.shape[0]
    flat = x.reshape(n, -1).astype(jnp.float32)
    x_min = flat.min(axis=1, keepdims=True)
    x_max = flat.max(axis=1, keepdims=True)
    rng = x_max - x_min
    safe_rng = jnp.where(rng > 0, rng, 1.0)
    levels = jnp.float32(2 ** bit - 1)
    inv_scale = levels / safe_rng
    scale = safe_rng / levels
    q = jnp.clip(jnp.round((flat - x_min) * inv_scale), 0.0, levels)
    y = q * scale + x_min
    y = jnp.where(rng > 0, y, flat)
    return y.reshape(x.shape).astype(x.dtype)


class Quantizer:
    """JAX/Pallas port of the PyTorch Quantizer module (forward only)."""

    # Below this many bytes the fixed per-call overhead (DMA setup, grid
    # prologue) dominates; use the fused pure-JAX path instead.
    _SMALL_TENSOR_BYTES = 128 * 1024

    def __init__(self, bit_data=None, bit_grad=None):
        self.bit_data = bit_data
        self.bit_grad = bit_grad  # only used in backward; unused here

    def __call__(self, x):
        return self.forward(x)

    def forward(self, x):
        if self.bit_data is None:
            # Identity: no reason to burn 2x HBM traffic on a copy kernel.
            return x

        n = x.shape[0]
        d = 1
        for s in x.shape[1:]:
            d *= s
        itemsize = jnp.dtype(x.dtype).itemsize

        if n == 0 or d == 0 or n * d * itemsize < self._SMALL_TENSOR_BYTES:
            return _reference_quantize(x, self.bit_data)

        budget, vmem_limit = _vmem_budget()
        # Absurdly wide rows that cannot fit even 8 double-buffered rows in
        # VMEM: fall back to the fused XLA path.
        if budget // (4 * d * itemsize) < 8:
            return _reference_quantize(x, self.bit_data)

        x2 = x.reshape(n, d)
        tb = _choose_block_rows(n, d, itemsize, budget)
        grid = (pl.cdiv(n, tb),)

        kernel = functools.partial(
            _quantize_kernel,
            n_levels_minus_1=(2 ** int(self.bit_data)) - 1,
        )

        cost = pl.CostEstimate(
            flops=8 * n * d,
            transcendentals=0,
            bytes_accessed=2 * n * d * itemsize,
        )

        out2 = pl.pallas_call(
            kernel,
            out_shape=jax.ShapeDtypeStruct((n, d), x.dtype),
            grid_spec=pltpu.PrefetchScalarGridSpec(
                num_scalar_prefetch=0,
                grid=grid,
                in_specs=[pl.BlockSpec((tb, d), lambda i: (i, 0))],
                out_specs=pl.BlockSpec((tb, d), lambda i: (i, 0)),
            ),
            compiler_params=pltpu.CompilerParams(
                dimension_semantics=("parallel",),
                vmem_limit_bytes=vmem_limit,
            ),
            cost_estimate=cost,
        )(x2)

        return out2.reshape(x.shape)


if __name__ == "__main__":
    k1, k2, k3 = jax.random.split(jax.random.PRNGKey(0), 3)

    # 1) Small NCHW activation (8 KiB) -> exercises the fused small-tensor
    #    fast path; semantics must still match the reference.
    x_small = jax.random.normal(k1, (2, 4, 16, 16), dtype=jnp.float32)
    q8 = Quantizer(bit_data=8, bit_grad=8)
    y_small = jax.block_until_ready(q8(x_small))
    y_small_ref = _reference_quantize(x_small, 8)
    assert y_small.shape == x_small.shape and y_small.dtype == x_small.dtype
    assert float(jnp.max(jnp.abs(y_small - y_small_ref))) < 1e-5

    # 2) Medium activation (256 KiB, D = 1024 multiple of 128) -> Pallas path,
    #    grid split into >= 2 blocks along the batch axis.
    x_mid = jax.random.normal(k2, (64, 4, 16, 16), dtype=jnp.float32)
    y_mid = jax.block_until_ready(q8(x_mid))
    y_mid_ref = _reference_quantize(x_mid, 8)
    assert y_mid.shape == x_mid.shape and y_mid.dtype == x_mid.dtype
    assert float(jnp.max(jnp.abs(y_mid - y_mid_ref))) < 1e-5

    # 3) Feature dim NOT a multiple of 128 (D = 3*5*7 = 105), large enough for
    #    the Pallas path -> exercises the un-padded, masked-lane store path.
    x_odd = jax.random.normal(k3, (512, 3, 5, 7), dtype=jnp.float32)
    q4 = Quantizer(bit_data=4)
    y_odd = jax.block_until_ready(q4(x_odd))
    y_odd_ref = _reference_quantize(x_odd, 4)
    assert y_odd.shape == x_odd.shape and y_odd.dtype == x_odd.dtype
    assert float(jnp.max(jnp.abs(y_odd - y_odd_ref))) < 1e-5

    # 4) bit_data=None (identity) path.
    ident = Quantizer(bit_data=None)
    y_id = jax.block_until_ready(ident(x_small))
    assert jnp.array_equal(y_id, x_small)

    print("KERNEL_OK")
</pallas_src>

<mosaic_0001>
module attributes {stable_mosaic.version = 11 : i64} {
  func.func @_quantize_kernel(%arg0: i32, %arg1: memref<32x1024xf32, #tpu.memory_space<vmem>>, %arg2: memref<32x1024xf32, #tpu.memory_space<vmem>>) attributes {dimension_semantics = [#tpu.dimension_semantics<parallel>], iteration_bounds = array<i64: 2>, scalar_prefetch = 0 : i64, scratch_operands = 0 : i64, tpu.core_type = #tpu.core_type<tc>, window_params = [{transform_indices = @transform_0, window_bounds = array<i64: 32, 1024>}, {transform_indices = @transform_1, window_bounds = array<i64: 32, 1024>}]} {
    %c0 = arith.constant 0 : index
    %c0_0 = arith.constant 0 : index
    %0 = vector.load %arg1[%c0, %c0_0] : memref<32x1024xf32, #tpu.memory_space<vmem>>, vector<32x1024xf32>
    %cst = arith.constant dense<0x7F800000> : vector<32xf32>
    %1 = vector.multi_reduction <minimumf>, %0, %cst [1] : vector<32x1024xf32> to vector<32xf32>
    %2 = vector.shape_cast %1 : vector<32xf32> to vector<32x1xf32>
    %cst_1 = arith.constant dense<0xFF800000> : vector<32xf32>
    %3 = vector.multi_reduction <maximumf>, %0, %cst_1 [1] : vector<32x1024xf32> to vector<32xf32>
    %4 = vector.shape_cast %3 : vector<32xf32> to vector<32x1xf32>
    %5 = arith.subf %4, %2 : vector<32x1xf32>
    %cst_2 = arith.constant 0.000000e+00 : f32
    %6 = vector.broadcast %cst_2 : f32 to vector<32x1xf32>
    %7 = arith.cmpf ogt, %5, %6 : vector<32x1xf32>
    %cst_3 = arith.constant 1.000000e+00 : f32
    %8 = vector.broadcast %cst_3 : f32 to vector<32x1xf32>
    %9 = arith.select %7, %5, %8 : vector<32x1xi1>, vector<32x1xf32>
    %cst_4 = arith.constant 2.550000e+02 : f32
    %10 = vector.broadcast %cst_4 : f32 to vector<32x1xf32>
    %11 = arith.divf %10, %9 : vector<32x1xf32>
    %cst_5 = arith.constant 2.550000e+02 : f32
    %12 = vector.broadcast %cst_5 : f32 to vector<32x1xf32>
    %13 = arith.divf %9, %12 : vector<32x1xf32>
    %14 = vector.broadcast %2 : vector<32x1xf32> to vector<32x1024xf32>
    %15 = arith.subf %0, %14 : vector<32x1024xf32>
    %16 = vector.broadcast %11 : vector<32x1xf32> to vector<32x1024xf32>
    %17 = arith.mulf %15, %16 : vector<32x1024xf32>
    %18 = math.roundeven %17 : vector<32x1024xf32>
    %cst_6 = arith.constant 0.000000e+00 : f32
    %cst_7 = arith.constant 2.550000e+02 : f32
    %19 = vector.broadcast %cst_6 : f32 to vector<32x1024xf32>
    %20 = arith.maximumf %19, %18 : vector<32x1024xf32>
    %21 = vector.broadcast %cst_7 : f32 to vector<32x1024xf32>
    %22 = arith.minimumf %21, %20 : vector<32x1024xf32>
    %23 = vector.broadcast %13 : vector<32x1xf32> to vector<32x1024xf32>
    %24 = arith.mulf %22, %23 : vector<32x1024xf32>
    %25 = vector.broadcast %2 : vector<32x1xf32> to vector<32x1024xf32>
    %26 = arith.addf %24, %25 : vector<32x1024xf32>
    %27 = vector.shape_cast %7 : vector<32x1xi1> to vector<32x1xi1>
    %28 = vector.broadcast %27 : vector<32x1xi1> to vector<32x1024xi1>
    %29 = arith.select %28, %26, %0 : vector<32x1024xi1>, vector<32x1024xf32>
    %c0_8 = arith.constant 0 : index
    %c0_9 = arith.constant 0 : index
    %30 = vector.load %arg2[%c0_8, %c0_9] : memref<32x1024xf32, #tpu.memory_space<vmem>>, vector<32x1024xf32>
    tpu.vector_store %arg2[%c0_8, %c0_9], %29 {strides = array<i32>} : memref<32x1024xf32, #tpu.memory_space<vmem>>, vector<32x1024xf32>,
    return
  }
  func.func @transform_0(%arg0: i32) -> (i32, i32) {
    %c0_i32 = arith.constant 0 : i32
    %c0_i32_0 = arith.constant 0 : i32
    return %arg0, %c0_i32 : i32, i32
  }
  func.func @transform_1(%arg0: i32) -> (i32, i32) {
    %c0_i32 = arith.constant 0 : i32
    %c0_i32_0 = arith.constant 0 : i32
    return %arg0, %c0_i32 : i32, i32
  }
}

</mosaic_0001>

<llo_original>
// kernel: tpu_custom_call.1
$region0: #{tpu_custom_call.1}
  #allocation0 [shape = 'u32[]', space=smem, size = 0x4, offset = 0x4, fixed_abs, tag = 'smem constant byte address 0x4 - core index']
  #allocation1 [shape = 'u32[144,128]{1,0:T(1,128)}', space=vmem, size = 0x12000, scoped, tag = 'internal scratch']
  %s0 = inlined_call_operand.hbm [shape: f32[64,1024], index: 0, kind: input, shape index: {}]
  %s1 = inlined_call_operand.hbm [shape: f32[64,1024], index: 1, kind: output, shape index: {}]
  %s2 = sld [smem:[#allocation0]]
  $region41: #{tpu_custom_call.1} parent=0
    _
  %s4 = ssub.s32 1, %s2
  %s5 = scalar_select 0, %s4, %s2
  $region1: #{tpu_custom_call.1} parent=0
    #allocation2 [shape = 'u8[262144]{0}', space=vmem, size = 0x40000, scoped, tag = 'input window, operand 0']
    #allocation3 [shape = 's32[2]{0}', space=sflag, size = 0x8, scoped, tag = 'scoped memory for tpu_custom_call.1']
    #allocation4 [shape = 's32[2]{0}', space=sflag, size = 0x8, scoped, tag = 'scoped memory for tpu_custom_call.1']
    #allocation5 [shape = 'u8[262144]{0}', space=vmem, size = 0x40000, scoped, tag = 'output window, operand 0']
    %6 = vsyncpa [#allocation3], 0
    %s7 = scalar_lea.sflag [#allocation3], 1
    %8 = vsyncpa %s7, 0
    %9 = vsyncpa [#allocation4], 0
    %s10 = scalar_lea.sflag [#allocation4], 1
    %11 = vsyncpa %s10, 0
    loop: start=0, step=1, limit=4
    $region2: #{tpu_custom_call.1} parent=1 // loop_pre_header
      _
    $region3: #{tpu_custom_call.1} parent=1 // loop_header
      %s13 = sphi 0, %s17
      %p14 = scmp.ge.s32.totalorder %s13, 4
      %s23 = sphi 0, %s25
      %s26 = sphi 0, %s23
      %s27 = sphi 0, %s26
      %s43 = sphi 0, %s27
      %s49 = sphi 0, %s51
      %s52 = sphi 0, %s49
      %s53 = sphi 0, %s52
      %s69 = sphi 0, %s53
    $region4: #{tpu_custom_call.1} parent=1 // loop_header_branch
      %16 = sbr.rel (%p14) target = $region8
    $region5: #{tpu_custom_call.1} parent=1 // loop_body
      %s18 = ssub.s32 %s13, 1
      %s19 = ssub.s32 %s13, 2
      %s20 = sadd.s32 %s13, 1
      %s21 = ssub.s32 %s13, %s20
      %p22 = scmp.eq.s32.totalorder %s21, 0
      %s24 = sadd.s32 %s23, 1
      %s25 = scalar_select %p22, %s23, %s24
      %p28 = pneg %p22
      %p29 = scmp.eq.s32.totalorder %s13, 1
      %p30 = por %p28, %p29
      %p31 = scmp.ne.s32.totalorder %s23, %s26
      %p32 = scmp.eq.s32.totalorder %s13, 0
      %p33 = por %p31, %p32
      %p34 = scmp.ne.s32.totalorder %s23, %s26
      %p35 = scmp.eq.s32.totalorder %s18, 1
      %p36 = por %p34, %p35
      %p37 = scmp.ne.s32.totalorder %s26, %s27
      %p38 = scmp.eq.s32.totalorder %s18, 0
      %p39 = por %p37, %p38
      %p40 = scmp.ne.s32.totalorder %s26, %s27
      %p41 = scmp.eq.s32.totalorder %s19, 1
      %p42 = por %p40, %p41
      %p44 = scmp.ne.s32.totalorder %s27, %s43
      %p45 = scmp.eq.s32.totalorder %s19, 0
      %p46 = por %p44, %p45
      %s47 = ssub.s32 %s13, %s20
      %p48 = scmp.eq.s32.totalorder %s47, 0
      %s50 = sadd.s32 %s49, 1
      %s51 = scalar_select %p48, %s49, %s50
      %p54 = pneg %p48
      %p55 = scmp.eq.s32.totalorder %s13, 1
      %p56 = por %p54, %p55
      %p57 = scmp.ne.s32.totalorder %s49, %s52
      %p58 = scmp.eq.s32.totalorder %s13, 0
      %p59 = por %p57, %p58
      %p60 = scmp.ne.s32.totalorder %s49, %s52
      %p61 = scmp.eq.s32.totalorder %s18, 1
      %p62 = por %p60, %p61
      %p63 = scmp.ne.s32.totalorder %s52, %s53
      %p64 = scmp.eq.s32.totalorder %s18, 0
      %p65 = por %p63, %p64
      %p66 = scmp.ne.s32.totalorder %s52, %s53
      %p67 = scmp.eq.s32.totalorder %s19, 1
      %p68 = por %p66, %p67
      %p70 = scmp.ne.s32.totalorder %s53, %s69
      %p71 = scmp.eq.s32.totalorder %s19, 0
      %p72 = por %p70, %p71
      %p73 = scmp.le.s32.totalorder 1, %s13
      %p74 = scmp.lt.s32.totalorder %s13, 3
      %p75 = pnand %p73, %p74
      %p76 = pneg %p75
      // Predicated region
      $region9: #{tpu_custom_call.1} parent=5 // pred_check
        _
      $region10: #{tpu_custom_call.1} parent=5 // pred_check_branch
        %78 = sbr.rel (%p75) target = $region12
      $region11: #{tpu_custom_call.1} parent=5 // pred_region
        %s79 = ssub.s32 %s13, 1
      $region12: #{tpu_custom_call.1} parent=5 // pred_fallthru
        _
      %p80 = scmp.lt.s32.totalorder %s13, 2
      // Predicated region
      $region13: #{tpu_custom_call.1} parent=5 // pred_check
        %p81 = pneg %p80
      $region14: #{tpu_custom_call.1} parent=5 // pred_check_branch
        %83 = sbr.rel (%p81) target = $region16
      $region15: #{tpu_custom_call.1} parent=5 // pred_region
        // Predicated region
        $region17: #{tpu_custom_call.1} parent=15 // pred_check
          %p84 = pneg %p33
        $region18: #{tpu_custom_call.1} parent=15 // pred_check_branch
          %86 = sbr.rel (%p84) target = $region20
        $region19: #{tpu_custom_call.1} parent=15 // pred_region
          %s87 = sand.u32 %s23, 1
          %s88 = scalar_lea.sflag [#allocation3], %s87
          %s89 = sand.u32 %s23, 1
          %s90 = smul.addr %s89, 256
          %s91 = scalar_lea.vmem [#allocation2], %s90
          %s92 = smul.u32 4, %s13
          %s94 = ssub.s32 4096, 4096
          %95 = vsyncadd %s88, %s94
          %s96 = smul.addr %s92, 8
          %s97 = smul.addr %s96, 128
          %s98 = scalar_lea.hbm %s0, %s97
          %s99 = sshll.u32 %s91, 4
          %s100 = int_to_ptr.vmem [resolvable:$true] %s99
          %105 = dma.hbm_to_vmem [thread:$0]  %s98, 4096, %s100, %s88, 1024, 1024, 64
        $region20: #{tpu_custom_call.1} parent=15 // pred_fallthru
          _
      $region16: #{tpu_custom_call.1} parent=5 // pred_fallthru
        _
      %p106 = scmp.le.s32.totalorder 1, %s13
      %p107 = scmp.lt.s32.totalorder %s13, 3
      %p108 = pnand %p106, %p107
      %p109 = pneg %p108
      // Predicated region
      $region21: #{tpu_custom_call.1} parent=5 // pred_check
        _
      $region22: #{tpu_custom_call.1} parent=5 // pred_check_branch
        %111 = sbr.rel (%p108) target = $region24
      $region23: #{tpu_custom_call.1} parent=5 // pred_region
        %s112 = ssub.s32 %s13, 1
        %s113 = sand.u32 %s26, 1
        %s114 = scalar_lea.sflag [#allocation3], %s113
        %s115 = sand.u32 %s26, 1
        %s116 = smul.addr %s115, 256
        %s117 = scalar_lea.vmem [#allocation2], %s116
        // Predicated region
        $region25: #{tpu_custom_call.1} parent=23 // pred_check
          %p118 = pneg %p39
        $region26: #{tpu_custom_call.1} parent=23 // pred_check_branch
          %120 = sbr.rel (%p118) target = $region28
        $region27: #{tpu_custom_call.1} parent=23 // pred_region
          %121 = dma.done %s114, 4096
        $region28: #{tpu_custom_call.1} parent=23 // pred_fallthru
          _
        %s122 = sand.u32 %s26, 1
        %s123 = scalar_lea.sflag [#allocation3], %s122
        %s124 = sand.u32 %s26, 1
        %s125 = smul.addr %s124, 256
        %s126 = scalar_lea.vmem [#allocation2], %s125
        %p127 = pneg %p39
        %p128 = pneg %p36
        %p129 = pneg %p65
        %p130 = pneg %p62
        %s131 = sand.u32 %s52, 1
        %s132 = scalar_lea.sflag [#allocation4], %s131
        %s133 = sand.u32 %s52, 1
        %s134 = smul.addr %s133, 256
        %s135 = scalar_lea.vmem [#allocation5], %s134
        %s136 = smul.u32 4, %s18
        %s137 = smul.u32 4, %s18
        %v138 = vld [vmem:[%s117] sm:$0xff]
        %v139 = vld [vmem:[%s117 + $0x8] sm:$0xff]
        %v140 = vld [vmem:[%s117 + $0x10] sm:$0xff]
        %v141 = vld [vmem:[%s117 + $0x18] sm:$0xff]
        %v142 = vld [vmem:[%s117 + $0x20] sm:$0xff]
        %v143 = vld [vmem:[%s117 + $0x28] sm:$0xff]
        %v144 = vld [vmem:[%s117 + $0x30] sm:$0xff]
        %v145 = vld [vmem:[%s117 + $0x38] sm:$0xff]
        %v146 = vld [vmem:[%s117 + $0x40] sm:$0xff]
        %v147 = vld [vmem:[%s117 + $0x48] sm:$0xff]
        %v148 = vld [vmem:[%s117 + $0x50] sm:$0xff]
        %v149 = vld [vmem:[%s117 + $0x58] sm:$0xff]
        %v150 = vld [vmem:[%s117 + $0x60] sm:$0xff]
        %v151 = vld [vmem:[%s117 + $0x68] sm:$0xff]
        %v152 = vld [vmem:[%s117 + $0x70] sm:$0xff]
        %v153 = vld [vmem:[%s117 + $0x78] sm:$0xff]
        %v154 = vld [vmem:[%s117 + $0x80] sm:$0xff]
        %v155 = vld [vmem:[%s117 + $0x88] sm:$0xff]
        %v156 = vld [vmem:[%s117 + $0x90] sm:$0xff]
        %v157 = vld [vmem:[%s117 + $0x98] sm:$0xff]
        %v158 = vld [vmem:[%s117 + $0xa0] sm:$0xff]
        %v159 = vld [vmem:[%s117 + $0xa8] sm:$0xff]
        %v160 = vld [vmem:[%s117 + $0xb0] sm:$0xff]
        %v161 = vld [vmem:[%s117 + $0xb8] sm:$0xff]
        %v162 = vld [vmem:[%s117 + $0xc0] sm:$0xff]
        %v163 = vld [vmem:[%s117 + $0xc8] sm:$0xff]
        %v164 = vld [vmem:[%s117 + $0xd0] sm:$0xff]
        %v165 = vld [vmem:[%s117 + $0xd8] sm:$0xff]
        %v166 = vld [vmem:[%s117 + $0xe0] sm:$0xff]
        %v167 = vld [vmem:[%s117 + $0xe8] sm:$0xff]
        %v168 = vld [vmem:[%s117 + $0xf0] sm:$0xff]
        %v169 = vld [vmem:[%s117 + $0xf8] sm:$0xff]
        %v170 = vmin.f32 %v138, %v139
        %v171 = vmin.f32 %v170, %v140
        %v172 = vmin.f32 %v171, %v141
        %v173 = vmin.f32 %v172, %v142
        %v174 = vmin.f32 %v173, %v143
        %v175 = vmin.f32 %v174, %v144
        %v176 = vmin.f32 %v175, %v145
        %177 = vmin.xlane.f32.xlu0 %v176
        %v178 = vpop.xlane.xlu0 %177
        %v179 = vmin.f32 %v146, %v147
        %v180 = vmin.f32 %v179, %v148
        %v181 = vmin.f32 %v180, %v149
        %v182 = vmin.f32 %v181, %v150
        %v183 = vmin.f32 %v182, %v151
        %v184 = vmin.f32 %v183, %v152
        %v185 = vmin.f32 %v184, %v153
        %186 = vmin.xlane.f32.xlu0 %v185
        %v187 = vpop.xlane.xlu0 %186
        %v188 = vmin.f32 %v154, %v155
        %v189 = vmin.f32 %v188, %v156
        %v190 = vmin.f32 %v189, %v157
        %v191 = vmin.f32 %v190, %v158
        %v192 = vmin.f32 %v191, %v159
        %v193 = vmin.f32 %v192, %v160
        %v194 = vmin.f32 %v193, %v161
        %195 = vmin.xlane.f32.xlu0 %v194
        %v196 = vpop.xlane.xlu0 %195
        %v197 = vmin.f32 %v162, %v163
        %v198 = vmin.f32 %v197, %v164
        %v199 = vmin.f32 %v198, %v165
        %v200 = vmin.f32 %v199, %v166
        %v201 = vmin.f32 %v200, %v167
        %v202 = vmin.f32 %v201, %v168
        %v203 = vmin.f32 %v202, %v169
        %204 = vmin.xlane.f32.xlu0 %v203
        %v205 = vpop.xlane.xlu0 %204
        %v206 = vmax.f32 %v138, %v139
        %v207 = vmax.f32 %v206, %v140
        %v208 = vmax.f32 %v207, %v141
        %v209 = vmax.f32 %v208, %v142
        %v210 = vmax.f32 %v209, %v143
        %v211 = vmax.f32 %v210, %v144
        %v212 = vmax.f32 %v211, %v145
        %213 = vmax.xlane.f32.xlu0 %v212
        %v214 = vpop.xlane.xlu0 %213
        %v215 = vmax.f32 %v146, %v147
        %v216 = vmax.f32 %v215, %v148
        %v217 = vmax.f32 %v216, %v149
        %v218 = vmax.f32 %v217, %v150
        %v219 = vmax.f32 %v218, %v151
        %v220 = vmax.f32 %v219, %v152
        %v221 = vmax.f32 %v220, %v153
        %222 = vmax.xlane.f32.xlu0 %v221
        %v223 = vpop.xlane.xlu0 %222
        %v224 = vmax.f32 %v154, %v155
        %v225 = vmax.f32 %v224, %v156
        %v226 = vmax.f32 %v225, %v157
        %v227 = vmax.f32 %v226, %v158
        %v228 = vmax.f32 %v227, %v159
        %v229 = vmax.f32 %v228, %v160
        %v230 = vmax.f32 %v229, %v161
        %231 = vmax.xlane.f32.xlu0 %v230
        %v232 = vpop.xlane.xlu0 %231
        %v233 = vmax.f32 %v162, %v163
        %v234 = vmax.f32 %v233, %v164
        %v235 = vmax.f32 %v234, %v165
        %v236 = vmax.f32 %v235, %v166
        %v237 = vmax.f32 %v236, %v167
        %v238 = vmax.f32 %v237, %v168
        %v239 = vmax.f32 %v238, %v169
        %240 = vmax.xlane.f32.xlu0 %v239
        %v241 = vpop.xlane.xlu0 %240
        %v242 = vsub.f32 %v214, %v178
        %v243 = vsub.f32 %v223, %v187
        %v244 = vsub.f32 %v232, %v196
        %v245 = vsub.f32 %v241, %v205
        %vm246 = vcmp.gt.f32.partialorder %v242, 0.0
        %vm247 = vcmp.gt.f32.partialorder %v243, 0.0
        %vm248 = vcmp.gt.f32.partialorder %v244, 0.0
        %vm249 = vcmp.gt.f32.partialorder %v245, 0.0
        %v250 = vsel %vm246, %v242, 1.0
        %v251 = vsel %vm247, %v243, 1.0
        %v252 = vsel %vm248, %v244, 1.0
        %v253 = vsel %vm249, %v245, 1.0
        %v254 = vrcp.pop %v250
        %v255 = vmul.f32 255.0, %v254
        %v256 = vrcp.pop %v251
        %v257 = vmul.f32 255.0, %v256
        %v258 = vrcp.pop %v252
        %v259 = vmul.f32 255.0, %v258
        %v260 = vrcp.pop %v253
        %v261 = vmul.f32 255.0, %v260
        %v262 = vrcp.pop 255.0
        %v263 = vmul.f32 %v250, %v262
        %v264 = vmul.f32 %v251, %v262
        %v265 = vmul.f32 %v252, %v262
        %v266 = vmul.f32 %v253, %v262
        %v267 = vsub.f32 %v138, %v178
        %v268 = vsub.f32 %v139, %v178
        %v269 = vsub.f32 %v140, %v178
        %v270 = vsub.f32 %v141, %v178
        %v271 = vsub.f32 %v142, %v178
        %v272 = vsub.f32 %v143, %v178
        %v273 = vsub.f32 %v144, %v178
        %v274 = vsub.f32 %v145, %v178
        %v275 = vsub.f32 %v146, %v187
        %v276 = vsub.f32 %v147, %v187
        %v277 = vsub.f32 %v148, %v187
        %v278 = vsub.f32 %v149, %v187
        %v279 = vsub.f32 %v150, %v187
        %v280 = vsub.f32 %v151, %v187
        %v281 = vsub.f32 %v152, %v187
        %v282 = vsub.f32 %v153, %v187
        %v283 = vsub.f32 %v154, %v196
        %v284 = vsub.f32 %v155, %v196
        %v285 = vsub.f32 %v156, %v196
        %v286 = vsub.f32 %v157, %v196
        %v287 = vsub.f32 %v158, %v196
        %v288 = vsub.f32 %v159, %v196
        %v289 = vsub.f32 %v160, %v196
        %v290 = vsub.f32 %v161, %v196
        %v291 = vsub.f32 %v162, %v205
        %v292 = vsub.f32 %v163, %v205
        %v293 = vsub.f32 %v164, %v205
        %v294 = vsub.f32 %v165, %v205
        %v295 = vsub.f32 %v166, %v205
        %v296 = vsub.f32 %v167, %v205
        %v297 = vsub.f32 %v168, %v205
        %v298 = vsub.f32 %v169, %v205
        %v299 = vmul.f32 %v267, %v255
        %v300 = vmul.f32 %v268, %v255
        %v301 = vmul.f32 %v269, %v255
        %v302 = vmul.f32 %v270, %v255
        %v303 = vmul.f32 %v271, %v255
        %v304 = vmul.f32 %v272, %v255
        %v305 = vmul.f32 %v273, %v255
        %v306 = vmul.f32 %v274, %v255
        %v307 = vmul.f32 %v275, %v257
        %v308 = vmul.f32 %v276, %v257
        %v309 = vmul.f32 %v277, %v257
        %v310 = vmul.f32 %v278, %v257
        %v311 = vmul.f32 %v279, %v257
        %v312 = vmul.f32 %v280, %v257
        %v313 = vmul.f32 %v281, %v257
        %v314 = vmul.f32 %v282, %v257
        %v315 = vmul.f32 %v283, %v259
        %v316 = vmul.f32 %v284, %v259
        %v317 = vmul.f32 %v285, %v259
        %v318 = vmul.f32 %v286, %v259
        %v319 = vmul.f32 %v287, %v259
        %v320 = vmul.f32 %v288, %v259
        %v321 = vmul.f32 %v289, %v259
        %v322 = vmul.f32 %v290, %v259
        %v323 = vmul.f32 %v291, %v261
        %v324 = vmul.f32 %v292, %v261
        %v325 = vmul.f32 %v293, %v261
        %v326 = vmul.f32 %v294, %v261
        %v327 = vmul.f32 %v295, %v261
        %v328 = vmul.f32 %v296, %v261
        %v329 = vmul.f32 %v297, %v261
        %v330 = vmul.f32 %v298, %v261
        %v331 = vround.ne.pseudo %v299
        %v332 = vround.ne.pseudo %v300
        %v333 = vround.ne.pseudo %v301
        %v334 = vround.ne.pseudo %v302
        %v335 = vround.ne.pseudo %v303
        %v336 = vround.ne.pseudo %v304
        %v337 = vround.ne.pseudo %v305
        %v338 = vround.ne.pseudo %v306
        %v339 = vround.ne.pseudo %v307
        %v340 = vround.ne.pseudo %v308
        %v341 = vround.ne.pseudo %v309
        %v342 = vround.ne.pseudo %v310
        %v343 = vround.ne.pseudo %v311
        %v344 = vround.ne.pseudo %v312
        %v345 = vround.ne.pseudo %v313
        %v346 = vround.ne.pseudo %v314
        %v347 = vround.ne.pseudo %v315
        %v348 = vround.ne.pseudo %v316
        %v349 = vround.ne.pseudo %v317
        %v350 = vround.ne.pseudo %v318
        %v351 = vround.ne.pseudo %v319
        %v352 = vround.ne.pseudo %v320
        %v353 = vround.ne.pseudo %v321
        %v354 = vround.ne.pseudo %v322
        %v355 = vround.ne.pseudo %v323
        %v356 = vround.ne.pseudo %v324
        %v357 = vround.ne.pseudo %v325
        %v358 = vround.ne.pseudo %v326
        %v359 = vround.ne.pseudo %v327
        %v360 = vround.ne.pseudo %v328
        %v361 = vround.ne.pseudo %v329
        %v362 = vround.ne.pseudo %v330
        %v363 = vmax.f32 %v331, 0.0
        %v364 = vmax.f32 %v332, 0.0
        %v365 = vmax.f32 %v333, 0.0
        %v366 = vmax.f32 %v334, 0.0
        %v367 = vmax.f32 %v335, 0.0
        %v368 = vmax.f32 %v336, 0.0
        %v369 = vmax.f32 %v337, 0.0
        %v370 = vmax.f32 %v338, 0.0
        %v371 = vmax.f32 %v339, 0.0
        %v372 = vmax.f32 %v340, 0.0
        %v373 = vmax.f32 %v341, 0.0
        %v374 = vmax.f32 %v342, 0.0
        %v375 = vmax.f32 %v343, 0.0
        %v376 = vmax.f32 %v344, 0.0
        %v377 = vmax.f32 %v345, 0.0
        %v378 = vmax.f32 %v346, 0.0
        %v379 = vmax.f32 %v347, 0.0
        %v380 = vmax.f32 %v348, 0.0
        %v381 = vmax.f32 %v349, 0.0
        %v382 = vmax.f32 %v350, 0.0
        %v383 = vmax.f32 %v351, 0.0
        %v384 = vmax.f32 %v352, 0.0
        %v385 = vmax.f32 %v353, 0.0
        %v386 = vmax.f32 %v354, 0.0
        %v387 = vmax.f32 %v355, 0.0
        %v388 = vmax.f32 %v356, 0.0
        %v389 = vmax.f32 %v357, 0.0
        %v390 = vmax.f32 %v358, 0.0
        %v391 = vmax.f32 %v359, 0.0
        %v392 = vmax.f32 %v360, 0.0
        %v393 = vmax.f32 %v361, 0.0
        %v394 = vmax.f32 %v362, 0.0
        %v395 = vmin.f32 %v363, 255.0
        %v396 = vmin.f32 %v364, 255.0
        %v397 = vmin.f32 %v365, 255.0
        %v398 = vmin.f32 %v366, 255.0
        %v399 = vmin.f32 %v367, 255.0
        %v400 = vmin.f32 %v368, 255.0
        %v401 = vmin.f32 %v369, 255.0
        %v402 = vmin.f32 %v370, 255.0
        %v403 = vmin.f32 %v371, 255.0
        %v404 = vmin.f32 %v372, 255.0
        %v405 = vmin.f32 %v373, 255.0
        %v406 = vmin.f32 %v374, 255.0
        %v407 = vmin.f32 %v375, 255.0
        %v408 = vmin.f32 %v376, 255.0
        %v409 = vmin.f32 %v377, 255.0
        %v410 = vmin.f32 %v378, 255.0
        %v411 = vmin.f32 %v379, 255.0
        %v412 = vmin.f32 %v380, 255.0
        %v413 = vmin.f32 %v381, 255.0
        %v414 = vmin.f32 %v382, 255.0
        %v415 = vmin.f32 %v383, 255.0
        %v416 = vmin.f32 %v384, 255.0
        %v417 = vmin.f32 %v385, 255.0
        %v418 = vmin.f32 %v386, 255.0
        %v419 = vmin.f32 %v387, 255.0
        %v420 = vmin.f32 %v388, 255.0
        %v421 = vmin.f32 %v389, 255.0
        %v422 = vmin.f32 %v390, 255.0
        %v423 = vmin.f32 %v391, 255.0
        %v424 = vmin.f32 %v392, 255.0
        %v425 = vmin.f32 %v393, 255.0
        %v426 = vmin.f32 %v394, 255.0
        %v427 = vmul.f32 %v395, %v263
        %v428 = vmul.f32 %v396, %v263
        %v429 = vmul.f32 %v397, %v263
        %v430 = vmul.f32 %v398, %v263
        %v431 = vmul.f32 %v399, %v263
        %v432 = vmul.f32 %v400, %v263
        %v433 = vmul.f32 %v401, %v263
        %v434 = vmul.f32 %v402, %v263
        %v435 = vmul.f32 %v403, %v264
        %v436 = vmul.f32 %v404, %v264
        %v437 = vmul.f32 %v405, %v264
        %v438 = vmul.f32 %v406, %v264
        %v439 = vmul.f32 %v407, %v264
        %v440 = vmul.f32 %v408, %v264
        %v441 = vmul.f32 %v409, %v264
        %v442 = vmul.f32 %v410, %v264
        %v443 = vmul.f32 %v411, %v265
        %v444 = vmul.f32 %v412, %v265
        %v445 = vmul.f32 %v413, %v265
        %v446 = vmul.f32 %v414, %v265
        %v447 = vmul.f32 %v415, %v265
        %v448 = vmul.f32 %v416, %v265
        %v449 = vmul.f32 %v417, %v265
        %v450 = vmul.f32 %v418, %v265
        %v451 = vmul.f32 %v419, %v266
        %v452 = vmul.f32 %v420, %v266
        %v453 = vmul.f32 %v421, %v266
        %v454 = vmul.f32 %v422, %v266
        %v455 = vmul.f32 %v423, %v266
        %v456 = vmul.f32 %v424, %v266
        %v457 = vmul.f32 %v425, %v266
        %v458 = vmul.f32 %v426, %v266
        %v459 = vadd.f32 %v427, %v178
        %v460 = vadd.f32 %v428, %v178
        %v461 = vadd.f32 %v429, %v178
        %v462 = vadd.f32 %v430, %v178
        %v463 = vadd.f32 %v431, %v178
        %v464 = vadd.f32 %v432, %v178
        %v465 = vadd.f32 %v433, %v178
        %v466 = vadd.f32 %v434, %v178
        %v467 = vadd.f32 %v435, %v187
        %v468 = vadd.f32 %v436, %v187
        %v469 = vadd.f32 %v437, %v187
        %v470 = vadd.f32 %v438, %v187
        %v471 = vadd.f32 %v439, %v187
        %v472 = vadd.f32 %v440, %v187
        %v473 = vadd.f32 %v441, %v187
        %v474 = vadd.f32 %v442, %v187
        %v475 = vadd.f32 %v443, %v196
        %v476 = vadd.f32 %v444, %v196
        %v477 = vadd.f32 %v445, %v196
        %v478 = vadd.f32 %v446, %v196
        %v479 = vadd.f32 %v447, %v196
        %v480 = vadd.f32 %v448, %v196
        %v481 = vadd.f32 %v449, %v196
        %v482 = vadd.f32 %v450, %v196
        %v483 = vadd.f32 %v451, %v205
        %v484 = vadd.f32 %v452, %v205
        %v485 = vadd.f32 %v453, %v205
        %v486 = vadd.f32 %v454, %v205
        %v487 = vadd.f32 %v455, %v205
        %v488 = vadd.f32 %v456, %v205
        %v489 = vadd.f32 %v457, %v205
        %v490 = vadd.f32 %v458, %v205
        %v491 = vsel %vm246, 1, 0
        %v492 = vsel %vm247, 1, 0
        %v493 = vsel %vm248, 1, 0
        %v494 = vsel %vm249, 1, 0
        %vm495 = vcmp.eq.s32.totalorder %v491, 1
        %vm496 = vcmp.eq.s32.totalorder %v492, 1
        %vm497 = vcmp.eq.s32.totalorder %v493, 1
        %vm498 = vcmp.eq.s32.totalorder %v494, 1
        %v499 = vsel %vm495, %v459, %v138
        %v500 = vsel %vm495, %v460, %v139
        %v501 = vsel %vm495, %v461, %v140
        %v502 = vsel %vm495, %v462, %v141
        %v503 = vsel %vm495, %v463, %v142
        %v504 = vsel %vm495, %v464, %v143
        %v505 = vsel %vm495, %v465, %v144
        %v506 = vsel %vm495, %v466, %v145
        %v507 = vsel %vm496, %v467, %v146
        %v508 = vsel %vm496, %v468, %v147
        %v509 = vsel %vm496, %v469, %v148
        %v510 = vsel %vm496, %v470, %v149
        %v511 = vsel %vm496, %v471, %v150
        %v512 = vsel %vm496, %v472, %v151
        %v513 = vsel %vm496, %v473, %v152
        %v514 = vsel %vm496, %v474, %v153
        %v515 = vsel %vm497, %v475, %v154
        %v516 = vsel %vm497, %v476, %v155
        %v517 = vsel %vm497, %v477, %v156
        %v518 = vsel %vm497, %v478, %v157
        %v519 = vsel %vm497, %v479, %v158
        %v520 = vsel %vm497, %v480, %v159
        %v521 = vsel %vm497, %v481, %v160
        %v522 = vsel %vm497, %v482, %v161
        %v523 = vsel %vm498, %v483, %v162
        %v524 = vsel %vm498, %v484, %v163
        %v525 = vsel %vm498, %v485, %v164
        %v526 = vsel %vm498, %v486, %v165
        %v527 = vsel %vm498, %v487, %v166
        %v528 = vsel %vm498, %v488, %v167
        %v529 = vsel %vm498, %v489, %v168
        %v530 = vsel %vm498, %v490, %v169
        %531 = vst [vmem:[%s135] sm:$0xff] %v499
        %532 = vst [vmem:[%s135 + $0x8] sm:$0xff] %v500
        %533 = vst [vmem:[%s135 + $0x10] sm:$0xff] %v501
        %534 = vst [vmem:[%s135 + $0x18] sm:$0xff] %v502
        %535 = vst [vmem:[%s135 + $0x20] sm:$0xff] %v503
        %536 = vst [vmem:[%s135 + $0x28] sm:$0xff] %v504
        %537 = vst [vmem:[%s135 + $0x30] sm:$0xff] %v505
        %538 = vst [vmem:[%s135 + $0x38] sm:$0xff] %v506
        %539 = vst [vmem:[%s135 + $0x40] sm:$0xff] %v507
        %540 = vst [vmem:[%s135 + $0x48] sm:$0xff] %v508
        %541 = vst [vmem:[%s135 + $0x50] sm:$0xff] %v509
        %542 = vst [vmem:[%s135 + $0x58] sm:$0xff] %v510
        %543 = vst [vmem:[%s135 + $0x60] sm:$0xff] %v511
        %544 = vst [vmem:[%s135 + $0x68] sm:$0xff] %v512
        %545 = vst [vmem:[%s135 + $0x70] sm:$0xff] %v513
        %546 = vst [vmem:[%s135 + $0x78] sm:$0xff] %v514
        %547 = vst [vmem:[%s135 + $0x80] sm:$0xff] %v515
        %548 = vst [vmem:[%s135 + $0x88] sm:$0xff] %v516
        %549 = vst [vmem:[%s135 + $0x90] sm:$0xff] %v517
        %550 = vst [vmem:[%s135 + $0x98] sm:$0xff] %v518
        %551 = vst [vmem:[%s135 + $0xa0] sm:$0xff] %v519
        %552 = vst [vmem:[%s135 + $0xa8] sm:$0xff] %v520
        %553 = vst [vmem:[%s135 + $0xb0] sm:$0xff] %v521
        %554 = vst [vmem:[%s135 + $0xb8] sm:$0xff] %v522
        %555 = vst [vmem:[%s135 + $0xc0] sm:$0xff] %v523
        %556 = vst [vmem:[%s135 + $0xc8] sm:$0xff] %v524
        %557 = vst [vmem:[%s135 + $0xd0] sm:$0xff] %v525
        %558 = vst [vmem:[%s135 + $0xd8] sm:$0xff] %v526
        %559 = vst [vmem:[%s135 + $0xe0] sm:$0xff] %v527
        %560 = vst [vmem:[%s135 + $0xe8] sm:$0xff] %v528
        %561 = vst [vmem:[%s135 + $0xf0] sm:$0xff] %v529
        %562 = vst [vmem:[%s135 + $0xf8] sm:$0xff] %v530
        %s563 = sand.u32 %s52, 1
        %s564 = scalar_lea.sflag [#allocation4], %s563
        %s565 = sand.u32 %s52, 1
        %s566 = smul.addr %s565, 256
        %s567 = scalar_lea.vmem [#allocation5], %s566
        // Predicated region
        $region29: #{tpu_custom_call.1} parent=23 // pred_check
          %p568 = pneg %p62
        $region30: #{tpu_custom_call.1} parent=23 // pred_check_branch
          %570 = sbr.rel (%p568) target = $region32
        $region31: #{tpu_custom_call.1} parent=23 // pred_region
          %s571 = smul.u32 4, %s18
          %s573 = ssub.s32 4096, 4096
          %574 = vsyncadd %s564, %s573
          %s575 = smul.addr %s571, 8
          %s576 = smul.addr %s575, 128
          %s577 = scalar_lea.hbm %s1, %s576
          %s578 = sshll.u32 %s567, 4
          %s579 = int_to_ptr.vmem [resolvable:$true] %s578
          %584 = dma.vmem_to_hbm [thread:$0]  %s579, 4096, %s577, %s564, 1024, 1024, 64
        $region32: #{tpu_custom_call.1} parent=23 // pred_fallthru
          _
      $region24: #{tpu_custom_call.1} parent=5 // pred_fallthru
        _
      %p585 = scmp.le.s32.totalorder 2, %s13
      // Predicated region
      $region33: #{tpu_custom_call.1} parent=5 // pred_check
        %p586 = pneg %p585
      $region34: #{tpu_custom_call.1} parent=5 // pred_check_branch
        %588 = sbr.rel (%p586) target = $region36
      $region35: #{tpu_custom_call.1} parent=5 // pred_region
        %s589 = ssub.s32 %s13, 2
        // Predicated region
        $region37: #{tpu_custom_call.1} parent=35 // pred_check
          %p590 = pneg %p68
        $region38: #{tpu_custom_call.1} parent=35 // pred_check_branch
          %592 = sbr.rel (%p590) target = $region40
        $region39: #{tpu_custom_call.1} parent=35 // pred_region
          %s593 = sand.u32 %s53, 1
          %s594 = scalar_lea.sflag [#allocation4], %s593
          %s595 = sand.u32 %s53, 1
          %s596 = smul.addr %s595, 256
          %s597 = scalar_lea.vmem [#allocation5], %s596
          %598 = dma.done %s594, 4096
        $region40: #{tpu_custom_call.1} parent=35 // pred_fallthru
          _
      $region36: #{tpu_custom_call.1} parent=5 // pred_fallthru
        _
    $region6: #{tpu_custom_call.1} parent=1 // loop_footer
      %s17 = sadd.s32 1, %s13
    $region7: #{tpu_custom_call.1} parent=1 // loop_footer_branch
      %12 = sbr.rel target = $region3
    $region8: #{tpu_custom_call.1} parent=1 // loop_exit
      _
    %599 = vsyncpa [#allocation3], 1
    %s600 = scalar_lea.sflag [#allocation3], 1
    %601 = vsyncpa %s600, 1
    %602 = vsyncpa [#allocation4], 1
    %s603 = scalar_lea.sflag [#allocation4], 1
    %604 = vsyncpa %s603, 1

</llo_original>
